<compile_context>
chip_gen: v7x
topology: tpu7x:2x2x1
jax: 0.10.0
libtpu: 0.0.40
codegen_flags: <defaults>
</compile_context>

<pallas_src>
import jax
import jax.numpy as jnp
from jax.experimental import pallas as pl
from jax.experimental.pallas import tpu as pltpu


def _round_up(n, m):
    return ((n + m - 1) // m) * m


def _mlp_kernel(x_ref, w123_ref, b123_ref, w4_ref, o_ref):
    """Fused 4-layer MLP on one batch tile (batch_tile rows)."""
    D = w4_ref.shape[1]                       # padded feature/hidden width

    # Layer 1: x arrives pre-cast to bf16; f32 MXU accumulation, f32 bias+ReLU.
    h = jnp.dot(x_ref[...], w123_ref[:, 0:D],
                preferred_element_type=jnp.float32)
    h = jnp.maximum(h + b123_ref[:, 0:D], 0.0)          # ReLU (nl1)

    h = jnp.dot(h.astype(jnp.bfloat16), w123_ref[:, D:2 * D],
                preferred_element_type=jnp.float32)
    h = jnp.maximum(h + b123_ref[:, D:2 * D], 0.0)       # ReLU (nl2)

    h = jnp.dot(h.astype(jnp.bfloat16), w123_ref[:, 2 * D:3 * D],
                preferred_element_type=jnp.float32)
    h = jnp.maximum(h + b123_ref[:, 2 * D:3 * D], 0.0)   # ReLU (nl3)

    # Layer 4 (H3 -> 1): VPU multiply + XLU lane reduction instead of a
    # degenerate Kx1 MXU matmul.  b4 is folded into w4 via a constant-1 lane
    # of h (see prepare_params), so no separate bias add is needed here.
    logits = jnp.sum(h * w4_ref[...], axis=-1)            # (batch_tile,)
    o_ref[...] = jax.nn.sigmoid(logits)[None, :].astype(o_ref.dtype)


def init_params(key, n_channels=9, time_range=13, hidden_channels=(128, 64, 32)):
    """PyTorch-layout params: w_i is (out, in), b_i is (out,), all f32.

    Mimics nn.Linear default init (uniform +-1/sqrt(fan_in)).
    """
    f_in = n_channels * time_range
    dims = [f_in, hidden_channels[0], hidden_channels[1], hidden_channels[2], 1]
    raw = {}
    for layer in range(4):
        din, dout = dims[layer], dims[layer + 1]
        key, kw, kb = jax.random.split(key, 3)
        bound = 1.0 / jnp.sqrt(float(din))
        raw[f"w{layer + 1}"] = jax.random.uniform(
            kw, (dout, din), jnp.float32, -bound, bound)
        raw[f"b{layer + 1}"] = jax.random.uniform(
            kb, (dout,), jnp.float32, -bound, bound)
    return raw


def prepare_params(raw):
    """Transpose to (in, out), zero-pad every dim to a common multiple of 128,
    concatenate the three hidden-layer weights/biases into single blocks, cast
    the MXU weights to bf16, and fold b4 into w4 via a constant-1 lane of h3.
    """
    F = raw["w1"].shape[1]
    H1, H2, H3 = raw["w1"].shape[0], raw["w2"].shape[0], raw["w3"].shape[0]
    # Common padded width (128 for the module defaults); +1 reserves a spare
    # lane in h3 to carry the folded b4.
    D = max(_round_up(F, 128), _round_up(H1, 128),
            _round_up(H2, 128), _round_up(H3 + 1, 128))

    def pad2(a, rows, cols):
        return jnp.pad(a, ((0, rows - a.shape[0]), (0, cols - a.shape[1])))

    w1 = pad2(raw["w1"].T, D, D)
    w2 = pad2(raw["w2"].T, D, D)
    w3 = pad2(raw["w3"].T, D, D)
    w123 = jnp.concatenate([w1, w2, w3], axis=1).astype(jnp.bfloat16)

    b1 = pad2(raw["b1"][None, :], 1, D)
    b2 = pad2(raw["b2"][None, :], 1, D)
    b3 = pad2(raw["b3"][None, :], 1, D)
    # Constant-1 lane: w3[:, H3] == 0 and b3[0, H3] == 1  =>  h3[:, H3] == 1,
    # so setting w4[0, H3] = b4 folds the final bias into the lane reduction.
    b3 = b3.at[0, H3].set(1.0)
    b123 = jnp.concatenate([b1, b2, b3], axis=1).astype(jnp.float32)

    w4 = pad2(raw["w4"].reshape(1, -1), 1, D).astype(jnp.float32)
    w4 = w4.at[0, H3].set(raw["b4"][0])
    return dict(w123=w123, b123=b123, w4=w4)


def discriminator_conless_forward(x, kparams, *, batch_tile=None):
    """x: [B, F] float32 (F = n_channels * time_range). Returns [B, 1] f32."""
    B, F = x.shape
    D = kparams["w4"].shape[1]
    assert F <= D and kparams["w123"].shape == (D, 3 * D)

    if batch_tile is None:
        B128 = _round_up(B, 128)
        if B128 <= 128:
            batch_tile = 128
        else:
            # Big tiles amortize per-step overhead; >= 2 steps keeps both v7x
            # TensorCores fed.  Cap at 2048 rows (~5 MiB VMEM total).
            batch_tile = min(2048, max(128, (B128 // 2) // 128 * 128))
    batch_tile = max(128, _round_up(batch_tile, 128))
    B_pad = _round_up(B, batch_tile)
    num_tiles = B_pad // batch_tile

    # Single fused convert(+pad) pass: the kernel reads bf16 x (half the HBM
    # bytes of f32) and does no further input casting.
    x_bf = x.astype(jnp.bfloat16)
    if (B_pad, D) != (B, F):
        x_bf = jnp.pad(x_bf, ((0, B_pad - B), (0, D - F)))

    full = lambda a: pl.BlockSpec(a.shape, lambda i: (0,) * a.ndim)

    flops = 2 * B_pad * D * (3 * D + 1)
    bytes_accessed = (int(x_bf.size) * 2
                      + int(kparams["w123"].size) * 2
                      + int(kparams["b123"].size) * 4
                      + int(kparams["w4"].size) * 4
                      + B_pad * 4)

    out = pl.pallas_call(
        _mlp_kernel,
        out_shape=jax.ShapeDtypeStruct((1, B_pad), jnp.float32),
        grid_spec=pltpu.PrefetchScalarGridSpec(
            num_scalar_prefetch=0,
            grid=(num_tiles,),
            in_specs=[
                pl.BlockSpec((batch_tile, D), lambda i: (i, 0)),   # x tile
                full(kparams["w123"]),                             # weights
                full(kparams["b123"]),                             # biases
                full(kparams["w4"]),                               # head + b4
            ],
            # Lane-dense output: batch on the 128-lane axis, unmasked stores.
            out_specs=pl.BlockSpec((1, batch_tile), lambda i: (0, i)),
        ),
        compiler_params=pltpu.CompilerParams(
            dimension_semantics=("parallel",)),
        cost_estimate=pl.CostEstimate(
            flops=int(flops),
            transcendentals=int(B_pad),
            bytes_accessed=int(bytes_accessed)),
    )(x_bf, kparams["w123"], kparams["b123"], kparams["w4"])

    return out[0, :B].reshape(B, 1)


def reference_forward_f32(x, raw):
    """Exact module semantics (pure f32) for sanity checking."""
    h = jnp.maximum(x @ raw["w1"].T + raw["b1"], 0.0)
    h = jnp.maximum(h @ raw["w2"].T + raw["b2"], 0.0)
    h = jnp.maximum(h @ raw["w3"].T + raw["b3"], 0.0)
    return jax.nn.sigmoid(h @ raw["w4"].T + raw["b4"])


def reference_forward_bf16(x, raw):
    """Reference with the same bf16-operand / f32-accumulate rounding as the kernel."""
    def mm(a, w):   # w is PyTorch layout (out, in)
        return jnp.dot(a.astype(jnp.bfloat16), w.T.astype(jnp.bfloat16),
                       preferred_element_type=jnp.float32)
    h = jnp.maximum(mm(x, raw["w1"]) + raw["b1"], 0.0)
    h = jnp.maximum(mm(h, raw["w2"]) + raw["b2"], 0.0)
    h = jnp.maximum(mm(h, raw["w3"]) + raw["b3"], 0.0)
    return jax.nn.sigmoid(h @ raw["w4"].T + raw["b4"])   # final layer f32 (VPU path)


if __name__ == "__main__":
    n_channels, time_range = 9, 13            # module defaults -> F = 117
    hidden_channels = (128, 64, 32)
    batch = 256                               # -> two 128-row parallel tiles

    key = jax.random.PRNGKey(0)
    key, kx = jax.random.split(key)
    raw = init_params(key, n_channels, time_range, hidden_channels)
    x = jax.random.normal(kx, (batch, n_channels * time_range), jnp.float32)

    kparams = prepare_params(raw)
    y = discriminator_conless_forward(x, kparams)
    y = jax.block_until_ready(y)
    assert y.shape == (batch, 1)

    y_bf16 = reference_forward_bf16(x, raw)   # same rounding as the kernel
    y_f32 = reference_forward_f32(x, raw)     # exact module semantics
    err_bf16 = float(jnp.max(jnp.abs(y - y_bf16)))
    err_f32 = float(jnp.max(jnp.abs(y - y_f32)))
    assert err_bf16 < 2e-3, f"mismatch vs bf16-matmul reference: {err_bf16}"
    assert err_f32 < 3e-2, f"mismatch vs f32 reference: {err_f32}"

    print("KERNEL_OK")
</pallas_src>

<mosaic_0001>
module attributes {stable_mosaic.version = 11 : i64} {
  func.func @_mlp_kernel(%arg0: i32, %arg1: memref<128x128xbf16, #tpu.memory_space<vmem>>, %arg2: memref<128x384xbf16, #tpu.memory_space<vmem>>, %arg3: memref<1x384xf32, #tpu.memory_space<vmem>>, %arg4: memref<1x128xf32, #tpu.memory_space<vmem>>, %arg5: memref<1x128xf32, #tpu.memory_space<vmem>>) attributes {dimension_semantics = [#tpu.dimension_semantics<parallel>], iteration_bounds = array<i64: 2>, scalar_prefetch = 0 : i64, scratch_operands = 0 : i64, tpu.core_type = #tpu.core_type<tc>, window_params = [{transform_indices = @transform_0, window_bounds = array<i64: 128, 128>}, {pipeline_mode = #tpu.pipeline_mode<synchronous>, transform_indices = @transform_1, window_bounds = array<i64: 128, 384>}, {pipeline_mode = #tpu.pipeline_mode<synchronous>, transform_indices = @transform_2, window_bounds = array<i64: 1, 384>}, {pipeline_mode = #tpu.pipeline_mode<synchronous>, transform_indices = @transform_3, window_bounds = array<i64: 1, 128>}, {transform_indices = @transform_4, window_bounds = array<i64: 1, 128>}]} {
    %c0 = arith.constant 0 : index
    %c0_0 = arith.constant 0 : index
    %0 = vector.load %arg1[%c0, %c0_0] : memref<128x128xbf16, #tpu.memory_space<vmem>>, vector<128x128xbf16>
    %c0_1 = arith.constant 0 : index
    %c0_2 = arith.constant 0 : index
    %1 = vector.load %arg2[%c0_1, %c0_2] : memref<128x384xbf16, #tpu.memory_space<vmem>>, vector<128x128xbf16>
    %cst = arith.constant dense<0.000000e+00> : vector<128x128xf32>
    %2 = tpu.matmul %0, %1, %cst {dimension_numbers = #tpu.dot_dimension_numbers<[1], [0], [0], [1], [0, 0, 1, 1], [], []>} : vector<128x128xbf16>, vector<128x128xbf16>, vector<128x128xf32> -> vector<128x128xf32>
    %c0_3 = arith.constant 0 : index
    %c0_4 = arith.constant 0 : index
    %3 = vector.load %arg3[%c0_3, %c0_4] : memref<1x384xf32, #tpu.memory_space<vmem>>, vector<1x128xf32>
    %4 = vector.broadcast %3 : vector<1x128xf32> to vector<128x128xf32>
    %5 = arith.addf %2, %4 : vector<128x128xf32>
    %cst_5 = arith.constant 0.000000e+00 : f32
    %6 = vector.broadcast %cst_5 : f32 to vector<128x128xf32>
    %7 = arith.maximumf %5, %6 : vector<128x128xf32>
    %8 = arith.truncf %7 : vector<128x128xf32> to vector<128x128xbf16>
    %c0_6 = arith.constant 0 : index
    %c128 = arith.constant 128 : index
    %9 = vector.load %arg2[%c0_6, %c128] : memref<128x384xbf16, #tpu.memory_space<vmem>>, vector<128x128xbf16>
    %cst_7 = arith.constant dense<0.000000e+00> : vector<128x128xf32>
    %10 = tpu.matmul %8, %9, %cst_7 {dimension_numbers = #tpu.dot_dimension_numbers<[1], [0], [0], [1], [0, 0, 1, 1], [], []>} : vector<128x128xbf16>, vector<128x128xbf16>, vector<128x128xf32> -> vector<128x128xf32>
    %c0_8 = arith.constant 0 : index
    %c128_9 = arith.constant 128 : index
    %11 = vector.load %arg3[%c0_8, %c128_9] : memref<1x384xf32, #tpu.memory_space<vmem>>, vector<1x128xf32>
    %12 = vector.broadcast %11 : vector<1x128xf32> to vector<128x128xf32>
    %13 = arith.addf %10, %12 : vector<128x128xf32>
    %cst_10 = arith.constant 0.000000e+00 : f32
    %14 = vector.broadcast %cst_10 : f32 to vector<128x128xf32>
    %15 = arith.maximumf %13, %14 : vector<128x128xf32>
    %16 = arith.truncf %15 : vector<128x128xf32> to vector<128x128xbf16>
    %c0_11 = arith.constant 0 : index
    %c256 = arith.constant 256 : index
    %17 = vector.load %arg2[%c0_11, %c256] : memref<128x384xbf16, #tpu.memory_space<vmem>>, vector<128x128xbf16>
    %cst_12 = arith.constant dense<0.000000e+00> : vector<128x128xf32>
    %18 = tpu.matmul %16, %17, %cst_12 {dimension_numbers = #tpu.dot_dimension_numbers<[1], [0], [0], [1], [0, 0, 1, 1], [], []>} : vector<128x128xbf16>, vector<128x128xbf16>, vector<128x128xf32> -> vector<128x128xf32>
    %c0_13 = arith.constant 0 : index
    %c256_14 = arith.constant 256 : index
    %19 = vector.load %arg3[%c0_13, %c256_14] : memref<1x384xf32, #tpu.memory_space<vmem>>, vector<1x128xf32>
    %20 = vector.broadcast %19 : vector<1x128xf32> to vector<128x128xf32>
    %21 = arith.addf %18, %20 : vector<128x128xf32>
    %cst_15 = arith.constant 0.000000e+00 : f32
    %22 = vector.broadcast %cst_15 : f32 to vector<128x128xf32>
    %23 = arith.maximumf %21, %22 : vector<128x128xf32>
    %c0_16 = arith.constant 0 : index
    %c0_17 = arith.constant 0 : index
    %24 = vector.load %arg4[%c0_16, %c0_17] : memref<1x128xf32, #tpu.memory_space<vmem>>, vector<1x128xf32>
    %25 = vector.broadcast %24 : vector<1x128xf32> to vector<128x128xf32>
    %26 = arith.mulf %23, %25 : vector<128x128xf32>
    %cst_18 = arith.constant dense<0.000000e+00> : vector<128xf32>
    %27 = vector.multi_reduction <add>, %26, %cst_18 [1] : vector<128x128xf32> to vector<128xf32>
    %28 = arith.negf %27 : vector<128xf32>
    %29 = math.exp %28 : vector<128xf32>
    %cst_19 = arith.constant 1.000000e+00 : f32
    %30 = vector.broadcast %cst_19 : f32 to vector<128xf32>
    %31 = arith.addf %30, %29 : vector<128xf32>
    %32 = arith.divf %30, %31 : vector<128xf32>
    %33 = vector.shape_cast %32 : vector<128xf32> to vector<1x128xf32>
    %c0_20 = arith.constant 0 : index
    %c0_21 = arith.constant 0 : index
    %34 = vector.load %arg5[%c0_20, %c0_21] : memref<1x128xf32, #tpu.memory_space<vmem>>, vector<1x128xf32>
    tpu.vector_store %arg5[%c0_20, %c0_21], %33 {strides = array<i32>} : memref<1x128xf32, #tpu.memory_space<vmem>>, vector<1x128xf32>,
    return
  }
  func.func @transform_0(%arg0: i32) -> (i32, i32) {
    %c0_i32 = arith.constant 0 : i32
    %c0_i32_0 = arith.constant 0 : i32
    return %arg0, %c0_i32 : i32, i32
  }
  func.func @transform_1(%arg0: i32) -> (i32, i32) {
    %c0_i32 = arith.constant 0 : i32
    %c0_i32_0 = arith.constant 0 : i32
    %c0_i32_1 = arith.constant 0 : i32
    return %c0_i32, %c0_i32_0 : i32, i32
  }
  func.func @transform_2(%arg0: i32) -> (i32, i32) {
    %c0_i32 = arith.constant 0 : i32
    %c0_i32_0 = arith.constant 0 : i32
    %c0_i32_1 = arith.constant 0 : i32
    return %c0_i32, %c0_i32_0 : i32, i32
  }
  func.func @transform_3(%arg0: i32) -> (i32, i32) {
    %c0_i32 = arith.constant 0 : i32
    %c0_i32_0 = arith.constant 0 : i32
    %c0_i32_1 = arith.constant 0 : i32
    return %c0_i32, %c0_i32_0 : i32, i32
  }
  func.func @transform_4(%arg0: i32) -> (i32, i32) {
    %c0_i32 = arith.constant 0 : i32
    %c0_i32_0 = arith.constant 0 : i32
    return %c0_i32, %arg0 : i32, i32
  }
}

</mosaic_0001>

<llo_original>
// kernel: tpu_custom_call.1
$region0: #{tpu_custom_call.1}
  #allocation0 [shape = 'u32[]', space=smem, size = 0x4, offset = 0x4, fixed_abs, tag = 'smem constant byte address 0x4 - core index']
  #allocation1 [shape = 'u32[144,128]{1,0:T(1,128)}', space=vmem, size = 0x12000, scoped, tag = 'internal scratch']
  %s0 = inlined_call_operand.hbm [shape: bf16[256,128], index: 0, kind: input, shape index: {}]
  %s1 = inlined_call_operand.hbm [shape: bf16[128,384], index: 1, kind: input, shape index: {}]
  %s2 = inlined_call_operand.vmem [shape: f32[1,384], index: 2, kind: input, shape index: {}]
  %s3 = inlined_call_operand.vmem [shape: f32[1,128], index: 3, kind: input, shape index: {}]
  %s4 = inlined_call_operand.hbm [shape: f32[1,256], index: 4, kind: output, shape index: {}]
  %s5 = sld [smem:[#allocation0]]
  $region57: #{tpu_custom_call.1} parent=0
    _
  %s7 = ssub.s32 1, %s5
  %s8 = scalar_select 0, %s7, %s5
  $region1: #{tpu_custom_call.1} parent=0
    #allocation2 [shape = 'u8[65536]{0}', space=vmem, size = 0x10000, scoped, tag = 'input window, operand 0']
    #allocation3 [shape = 's32[2]{0}', space=sflag, size = 0x8, scoped, tag = 'scoped memory for tpu_custom_call.1']
    #allocation4 [shape = 's32[2]{0}', space=sflag, size = 0x8, scoped, tag = 'scoped memory for tpu_custom_call.1']
    #allocation5 [shape = 'u8[98304]{0}', space=vmem, size = 0x18000, scoped, tag = 'input window, operand 1, single buffered']
    #allocation6 [shape = 's32[1]{0}', space=sflag, size = 0x4, scoped, tag = 'scoped memory for tpu_custom_call.1']
    #allocation7 [shape = 'u8[1024]{0}', space=vmem, size = 0x400, scoped, tag = 'output window, operand 0']
    %9 = vsyncpa [#allocation3], 0
    %s10 = scalar_lea.sflag [#allocation3], 1
    %11 = vsyncpa %s10, 0
    %12 = vsyncpa [#allocation6], 0
    %13 = vsyncpa [#allocation4], 0
    %s14 = scalar_lea.sflag [#allocation4], 1
    %15 = vsyncpa %s14, 0
    loop: start=0, step=1, limit=4
    $region2: #{tpu_custom_call.1} parent=1 // loop_pre_header
      _
    $region3: #{tpu_custom_call.1} parent=1 // loop_header
      %s17 = sphi 0, %s21
      %p18 = scmp.ge.s32.totalorder %s17, 4
      %s27 = sphi 0, %s29
      %s30 = sphi 0, %s27
      %s31 = sphi 0, %s30
      %s47 = sphi 0, %s31
      %s51 = sphi 0, %s51
      %s53 = sphi 0, %s51
      %s54 = sphi 0, %s53
      %s68 = sphi 0, %s54
      %s72 = sphi 0, %s72
      %s74 = sphi 0, %s72
      %s75 = sphi 0, %s74
      %s89 = sphi 0, %s75
      %s93 = sphi 0, %s93
      %s95 = sphi 0, %s93
      %s96 = sphi 0, %s95
      %s110 = sphi 0, %s96
      %s116 = sphi 0, %s118
      %s119 = sphi 0, %s116
      %s120 = sphi 0, %s119
      %s136 = sphi 0, %s120
    $region4: #{tpu_custom_call.1} parent=1 // loop_header_branch
      %20 = sbr.rel (%p18) target = $region8
    $region5: #{tpu_custom_call.1} parent=1 // loop_body
      %s22 = ssub.s32 %s17, 1
      %s23 = ssub.s32 %s17, 2
      %s24 = sadd.s32 %s17, 1
      %s25 = ssub.s32 %s17, %s24
      %p26 = scmp.eq.s32.totalorder %s25, 0
      %s28 = sadd.s32 %s27, 1
      %s29 = scalar_select %p26, %s27, %s28
      %p32 = pneg %p26
      %p33 = scmp.eq.s32.totalorder %s17, 1
      %p34 = por %p32, %p33
      %p35 = scmp.ne.s32.totalorder %s27, %s30
      %p36 = scmp.eq.s32.totalorder %s17, 0
      %p37 = por %p35, %p36
      %p38 = scmp.ne.s32.totalorder %s27, %s30
      %p39 = scmp.eq.s32.totalorder %s22, 1
      %p40 = por %p38, %p39
      %p41 = scmp.ne.s32.totalorder %s30, %s31
      %p42 = scmp.eq.s32.totalorder %s22, 0
      %p43 = por %p41, %p42
      %p44 = scmp.ne.s32.totalorder %s30, %s31
      %p45 = scmp.eq.s32.totalorder %s23, 1
      %p46 = por %p44, %p45
      %p48 = scmp.ne.s32.totalorder %s31, %s47
      %p49 = scmp.eq.s32.totalorder %s23, 0
      %p50 = por %p48, %p49
      %s52 = sadd.s32 %s51, 1
      %p55 = scmp.eq.s32.totalorder %s17, 1
      %p56 = scmp.ne.s32.totalorder %s51, %s53
      %p57 = scmp.eq.s32.totalorder %s17, 0
      %p58 = por %p56, %p57
      %p59 = scmp.ne.s32.totalorder %s51, %s53
      %p60 = scmp.eq.s32.totalorder %s22, 1
      %p61 = por %p59, %p60
      %p62 = scmp.ne.s32.totalorder %s53, %s54
      %p63 = scmp.eq.s32.totalorder %s22, 0
      %p64 = por %p62, %p63
      %p65 = scmp.ne.s32.totalorder %s53, %s54
      %p66 = scmp.eq.s32.totalorder %s23, 1
      %p67 = por %p65, %p66
      %p69 = scmp.ne.s32.totalorder %s54, %s68
      %p70 = scmp.eq.s32.totalorder %s23, 0
      %p71 = por %p69, %p70
      %s73 = sadd.s32 %s72, 1
      %p76 = scmp.eq.s32.totalorder %s17, 1
      %p77 = scmp.ne.s32.totalorder %s72, %s74
      %p78 = scmp.eq.s32.totalorder %s17, 0
      %p79 = por %p77, %p78
      %p80 = scmp.ne.s32.totalorder %s72, %s74
      %p81 = scmp.eq.s32.totalorder %s22, 1
      %p82 = por %p80, %p81
      %p83 = scmp.ne.s32.totalorder %s74, %s75
      %p84 = scmp.eq.s32.totalorder %s22, 0
      %p85 = por %p83, %p84
      %p86 = scmp.ne.s32.totalorder %s74, %s75
      %p87 = scmp.eq.s32.totalorder %s23, 1
      %p88 = por %p86, %p87
      %p90 = scmp.ne.s32.totalorder %s75, %s89
      %p91 = scmp.eq.s32.totalorder %s23, 0
      %p92 = por %p90, %p91
      %s94 = sadd.s32 %s93, 1
      %p97 = scmp.eq.s32.totalorder %s17, 1
      %p98 = scmp.ne.s32.totalorder %s93, %s95
      %p99 = scmp.eq.s32.totalorder %s17, 0
      %p100 = por %p98, %p99
      %p101 = scmp.ne.s32.totalorder %s93, %s95
      %p102 = scmp.eq.s32.totalorder %s22, 1
      %p103 = por %p101, %p102
      %p104 = scmp.ne.s32.totalorder %s95, %s96
      %p105 = scmp.eq.s32.totalorder %s22, 0
      %p106 = por %p104, %p105
      %p107 = scmp.ne.s32.totalorder %s95, %s96
      %p108 = scmp.eq.s32.totalorder %s23, 1
      %p109 = por %p107, %p108
      %p111 = scmp.ne.s32.totalorder %s96, %s110
      %p112 = scmp.eq.s32.totalorder %s23, 0
      %p113 = por %p111, %p112
      %s114 = ssub.s32 %s17, %s24
      %p115 = scmp.eq.s32.totalorder %s114, 0
      %s117 = sadd.s32 %s116, 1
      %s118 = scalar_select %p115, %s116, %s117
      %p121 = pneg %p115
      %p122 = scmp.eq.s32.totalorder %s17, 1
      %p123 = por %p121, %p122
      %p124 = scmp.ne.s32.totalorder %s116, %s119
      %p125 = scmp.eq.s32.totalorder %s17, 0
      %p126 = por %p124, %p125
      %p127 = scmp.ne.s32.totalorder %s116, %s119
      %p128 = scmp.eq.s32.totalorder %s22, 1
      %p129 = por %p127, %p128
      %p130 = scmp.ne.s32.totalorder %s119, %s120
      %p131 = scmp.eq.s32.totalorder %s22, 0
      %p132 = por %p130, %p131
      %p133 = scmp.ne.s32.totalorder %s119, %s120
      %p134 = scmp.eq.s32.totalorder %s23, 1
      %p135 = por %p133, %p134
      %p137 = scmp.ne.s32.totalorder %s120, %s136
      %p138 = scmp.eq.s32.totalorder %s23, 0
      %p139 = por %p137, %p138
      %p140 = scmp.le.s32.totalorder 1, %s17
      %p141 = scmp.lt.s32.totalorder %s17, 3
      %p142 = pnand %p140, %p141
      %p143 = pneg %p142
      // Predicated region
      $region9: #{tpu_custom_call.1} parent=5 // pred_check
        _
      $region10: #{tpu_custom_call.1} parent=5 // pred_check_branch
        %145 = sbr.rel (%p142) target = $region12
      $region11: #{tpu_custom_call.1} parent=5 // pred_region
        %s146 = ssub.s32 %s17, 1
        // Predicated region
        $region13: #{tpu_custom_call.1} parent=11 // pred_check
          %p147 = pneg %p64
        $region14: #{tpu_custom_call.1} parent=11 // pred_check_branch
          %149 = sbr.rel (%p147) target = $region16
        $region15: #{tpu_custom_call.1} parent=11 // pred_region
          %s151 = ssub.s32 3072, 3072
          %152 = vsyncadd [#allocation6], %s151
          %s153 = sshll.u32 [#allocation5], 4
          %s154 = int_to_ptr.vmem [resolvable:$true] %s153
          %159 = dma.hbm_to_vmem [thread:$0]  %s1, 3072, %s154, [#allocation6], 192, 192, 12
        $region16: #{tpu_custom_call.1} parent=11 // pred_fallthru
          _
        // Predicated region
        $region17: #{tpu_custom_call.1} parent=11 // pred_check
          %p160 = pneg %p85
        $region18: #{tpu_custom_call.1} parent=11 // pred_check_branch
          %162 = sbr.rel (%p160) target = $region20
        $region19: #{tpu_custom_call.1} parent=11 // pred_region
          _
        $region20: #{tpu_custom_call.1} parent=11 // pred_fallthru
          _
        // Predicated region
        $region21: #{tpu_custom_call.1} parent=11 // pred_check
          %p163 = pneg %p106
        $region22: #{tpu_custom_call.1} parent=11 // pred_check_branch
          %165 = sbr.rel (%p163) target = $region24
        $region23: #{tpu_custom_call.1} parent=11 // pred_region
          _
        $region24: #{tpu_custom_call.1} parent=11 // pred_fallthru
          _
      $region12: #{tpu_custom_call.1} parent=5 // pred_fallthru
        _
      %p166 = scmp.lt.s32.totalorder %s17, 2
      // Predicated region
      $region25: #{tpu_custom_call.1} parent=5 // pred_check
        %p167 = pneg %p166
      $region26: #{tpu_custom_call.1} parent=5 // pred_check_branch
        %169 = sbr.rel (%p167) target = $region28
      $region27: #{tpu_custom_call.1} parent=5 // pred_region
        // Predicated region
        $region29: #{tpu_custom_call.1} parent=27 // pred_check
          %p170 = pneg %p37
        $region30: #{tpu_custom_call.1} parent=27 // pred_check_branch
          %172 = sbr.rel (%p170) target = $region32
        $region31: #{tpu_custom_call.1} parent=27 // pred_region
          %s173 = sand.u32 %s27, 1
          %s174 = scalar_lea.sflag [#allocation3], %s173
          %s175 = sand.u32 %s27, 1
          %s176 = smul.addr %s175, 64
          %s177 = scalar_lea.vmem [#allocation2], %s176
          %s178 = smul.u32 16, %s17
          %s180 = ssub.s32 1024, 1024
          %181 = vsyncadd %s174, %s180
          %s182 = smul.addr %s178, 64
          %s183 = scalar_lea.hbm %s0, %s182
          %s184 = sshll.u32 %s177, 4
          %s185 = int_to_ptr.vmem [resolvable:$true] %s184
          %190 = dma.hbm_to_vmem [thread:$0]  %s183, 1024, %s185, %s174, 64, 64, 4
        $region32: #{tpu_custom_call.1} parent=27 // pred_fallthru
          _
      $region28: #{tpu_custom_call.1} parent=5 // pred_fallthru
        _
      %p191 = scmp.le.s32.totalorder 1, %s17
      %p192 = scmp.lt.s32.totalorder %s17, 3
      %p193 = pnand %p191, %p192
      %p194 = pneg %p193
      // Predicated region
      $region33: #{tpu_custom_call.1} parent=5 // pred_check
        _
      $region34: #{tpu_custom_call.1} parent=5 // pred_check_branch
        %196 = sbr.rel (%p193) target = $region36
      $region35: #{tpu_custom_call.1} parent=5 // pred_region
        %s197 = ssub.s32 %s17, 1
        %s198 = sand.u32 %s30, 1
        %s199 = scalar_lea.sflag [#allocation3], %s198
        %s200 = sand.u32 %s30, 1
        %s201 = smul.addr %s200, 64
        %s202 = scalar_lea.vmem [#allocation2], %s201
        // Predicated region
        $region37: #{tpu_custom_call.1} parent=35 // pred_check
          %p203 = pneg %p43
        $region38: #{tpu_custom_call.1} parent=35 // pred_check_branch
          %205 = sbr.rel (%p203) target = $region40
        $region39: #{tpu_custom_call.1} parent=35 // pred_region
          %206 = dma.done %s199, 1024
        $region40: #{tpu_custom_call.1} parent=35 // pred_fallthru
          _
        // Predicated region
        $region41: #{tpu_custom_call.1} parent=35 // pred_check
          %p207 = pneg %p64
        $region42: #{tpu_custom_call.1} parent=35 // pred_check_branch
          %209 = sbr.rel (%p207) target = $region44
        $region43: #{tpu_custom_call.1} parent=35 // pred_region
          %210 = dma.done [#allocation6], 3072
        $region44: #{tpu_custom_call.1} parent=35 // pred_fallthru
          _
        %s211 = sand.u32 %s30, 1
        %s212 = scalar_lea.sflag [#allocation3], %s211
        %s213 = sand.u32 %s30, 1
        %s214 = smul.addr %s213, 64
        %s215 = scalar_lea.vmem [#allocation2], %s214
        %p216 = pneg %p43
        %p217 = pneg %p40
        %p218 = pneg %p64
        %p219 = pneg %p61
        %p220 = pneg %p85
        %p221 = pneg %p82
        %p222 = pneg %p106
        %p223 = pneg %p103
        %p224 = pneg %p132
        %p225 = pneg %p129
        %s226 = sand.u32 %s119, 1
        %s227 = scalar_lea.sflag [#allocation4], %s226
        %s228 = sand.u32 %s119, 1
        %s229 = scalar_lea.vmem [#allocation7], %s228
        %s230 = smul.u32 16, %s22
        %v232 = vld [vmem:[%s202] sm:$0xf]
        %v233 = vld [vmem:[%s202 + $0x4] sm:$0xf]
        %v234 = vld [vmem:[%s202 + $0x8] sm:$0xf]
        %v235 = vld [vmem:[%s202 + $0xc] sm:$0xf]
        %v236 = vld [vmem:[%s202 + $0x10] sm:$0xf]
        %v237 = vld [vmem:[%s202 + $0x14] sm:$0xf]
        %v238 = vld [vmem:[%s202 + $0x18] sm:$0xf]
        %v239 = vld [vmem:[%s202 + $0x1c] sm:$0xf]
        %v240 = vld [vmem:[%s202 + $0x20] sm:$0xf]
        %v241 = vld [vmem:[%s202 + $0x24] sm:$0xf]
        %v242 = vld [vmem:[%s202 + $0x28] sm:$0xf]
        %v243 = vld [vmem:[%s202 + $0x2c] sm:$0xf]
        %v244 = vld [vmem:[%s202 + $0x30] sm:$0xf]
        %v245 = vld [vmem:[%s202 + $0x34] sm:$0xf]
        %v246 = vld [vmem:[%s202 + $0x38] sm:$0xf]
        %v247 = vld [vmem:[%s202 + $0x3c] sm:$0xf]
        %v248 = vld [vmem:[#allocation5] sm:$0xf]
        %v249 = vld [vmem:[#allocation5 + $0xc] sm:$0xf]
        %v250 = vld [vmem:[#allocation5 + $0x18] sm:$0xf]
        %v251 = vld [vmem:[#allocation5 + $0x24] sm:$0xf]
        %v252 = vld [vmem:[#allocation5 + $0x30] sm:$0xf]
        %v253 = vld [vmem:[#allocation5 + $0x3c] sm:$0xf]
        %v254 = vld [vmem:[#allocation5 + $0x48] sm:$0xf]
        %v255 = vld [vmem:[#allocation5 + $0x54] sm:$0xf]
        %v256 = vld [vmem:[#allocation5 + $0x60] sm:$0xf]
        %v257 = vld [vmem:[#allocation5 + $0x6c] sm:$0xf]
        %v258 = vld [vmem:[#allocation5 + $0x78] sm:$0xf]
        %v259 = vld [vmem:[#allocation5 + $0x84] sm:$0xf]
        %v260 = vld [vmem:[#allocation5 + $0x90] sm:$0xf]
        %v261 = vld [vmem:[#allocation5 + $0x9c] sm:$0xf]
        %v262 = vld [vmem:[#allocation5 + $0xa8] sm:$0xf]
        %v263 = vld [vmem:[#allocation5 + $0xb4] sm:$0xf]
        %v264 = vld [vmem:[%s2] sm:$0x1]
        %v266 = vlaneseq
        %v267 = vshrl.u32 %v266, 7
        %v268 = vsub.s32 0, %v267
        %v269 = vrot.slane %v264, %v268
        %v287 = vunpack.c.l.b16 %v232
        %v288 = vunpack.c.l.b16 %v233
        %v289 = vunpack.c.l.b16 %v234
        %v290 = vunpack.c.l.b16 %v235
        %v291 = vunpack.c.l.b16 %v236
        %v292 = vunpack.c.l.b16 %v237
        %v293 = vunpack.c.l.b16 %v238
        %v294 = vunpack.c.l.b16 %v239
        %v295 = vunpack.c.l.b16 %v240
        %v296 = vunpack.c.l.b16 %v241
        %v297 = vunpack.c.l.b16 %v242
        %v298 = vunpack.c.l.b16 %v243
        %v299 = vunpack.c.l.b16 %v244
        %v300 = vunpack.c.l.b16 %v245
        %v301 = vunpack.c.l.b16 %v246
        %v302 = vunpack.c.l.b16 %v247
        %v303 = vpack.c.b16 %v288, %v287
        %v304 = vpack.c.b16 %v290, %v289
        %v305 = vpack.c.b16 %v292, %v291
        %v306 = vpack.c.b16 %v294, %v293
        %v307 = vpack.c.b16 %v296, %v295
        %v308 = vpack.c.b16 %v298, %v297
        %v309 = vpack.c.b16 %v300, %v299
        %v310 = vpack.c.b16 %v302, %v301
        %v335 = vunpack.c.l.b16 %v248
        %v336 = vunpack.c.l.b16 %v249
        %v337 = vunpack.c.l.b16 %v250
        %v338 = vunpack.c.l.b16 %v251
        %v339 = vunpack.c.l.b16 %v252
        %v340 = vunpack.c.l.b16 %v253
        %v341 = vunpack.c.l.b16 %v254
        %v342 = vunpack.c.l.b16 %v255
        %v343 = vunpack.c.l.b16 %v256
        %v344 = vunpack.c.l.b16 %v257
        %v345 = vunpack.c.l.b16 %v258
        %v346 = vunpack.c.l.b16 %v259
        %v347 = vunpack.c.l.b16 %v260
        %v348 = vunpack.c.l.b16 %v261
        %v349 = vunpack.c.l.b16 %v262
        %v350 = vunpack.c.l.b16 %v263
        %v351 = vpack.c.b16 %v336, %v335
        %v352 = vpack.c.b16 %v338, %v337
        %v353 = vpack.c.b16 %v340, %v339
        %v354 = vpack.c.b16 %v342, %v341
        %v355 = vpack.c.b16 %v344, %v343
        %v356 = vpack.c.b16 %v346, %v345
        %v357 = vpack.c.b16 %v348, %v347
        %v358 = vpack.c.b16 %v350, %v349
        %367 = vmatprep.subr.bf16.mxu0 0
        %368 = vmatpush1.bf16.msra.mxu0 %v351
        %369 = vmatprep.subr.bf16.mxu0 0
        %370 = vmatpush1.bf16.msra.mxu0 %v352
        %371 = vmatprep.subr.bf16.mxu0 0
        %372 = vmatpush1.bf16.msra.mxu0 %v353
        %373 = vmatprep.subr.bf16.mxu0 0
        %374 = vmatpush1.bf16.msra.mxu0 %v354
        %375 = vmatprep.subr.bf16.mxu0 0
        %376 = vmatpush1.bf16.msra.mxu0 %v355
        %377 = vmatprep.subr.bf16.mxu0 0
        %378 = vmatpush1.bf16.msra.mxu0 %v356
        %379 = vmatprep.subr.bf16.mxu0 0
        %380 = vmatpush1.bf16.msra.mxu0 %v357
        %381 = vmatprep.subr.bf16.mxu0 0
        %382 = vmatpush1.bf16.msra.mxu0 %v358
        %383 = vmatprep.subr.bf16.mxu0 0
        %384 = vmatpush1.bf16.msra.mxu0 0
        %385 = vmatprep.subr.bf16.mxu0 0
        %386 = vmatpush1.bf16.msra.mxu0 0
        %387 = vmatprep.subr.bf16.mxu0 0
        %388 = vmatpush1.bf16.msra.mxu0 0
        %389 = vmatprep.subr.bf16.mxu0 0
        %390 = vmatpush1.bf16.msra.mxu0 0
        %391 = vmatprep.subr.bf16.mxu0 0
        %392 = vmatpush1.bf16.msra.mxu0 0
        %393 = vmatprep.subr.bf16.mxu0 0
        %394 = vmatpush1.bf16.msra.mxu0 0
        %395 = vmatprep.subr.bf16.mxu0 0
        %396 = vmatpush1.bf16.msra.mxu0 0
        %397 = vmatprep.subr.bf16.mxu0 0
        %398 = vmatpush1.bf16.msra.mxu0 0
        %399 = vmatprep.mubr.bf16.mxu0 0
        %400 = vmatmul.mubr.bf16.gmra.mrb[0].mxu0 %v303
        %v401 = vpop.f32.mrb[0].mxu0
        %v402 = vadd.f32 %v269, %v401
        %v403 = vpop.f32.mrb[0].mxu0
        %v404 = vpop.f32.mrb[0].mxu0
        %v405 = vadd.f32 %v269, %v404
        %v406 = vpop.f32.mrb[0].mxu0
        %407 = vmatprep.mubr.bf16.mxu0 0
        %408 = vmatmul.mubr.bf16.gmra.mrb[0].mxu0 %v304
        %v409 = vpop.f32.mrb[0].mxu0
        %v410 = vadd.f32 %v269, %v409
        %v411 = vpop.f32.mrb[0].mxu0
        %v412 = vpop.f32.mrb[0].mxu0
        %v413 = vadd.f32 %v269, %v412
        %v414 = vpop.f32.mrb[0].mxu0
        %415 = vmatprep.mubr.bf16.mxu0 0
        %416 = vmatmul.mubr.bf16.gmra.mrb[0].mxu0 %v305
        %v417 = vpop.f32.mrb[0].mxu0
        %v418 = vadd.f32 %v269, %v417
        %v419 = vpop.f32.mrb[0].mxu0
        %v420 = vpop.f32.mrb[0].mxu0
        %v421 = vadd.f32 %v269, %v420
        %v422 = vpop.f32.mrb[0].mxu0
        %423 = vmatprep.mubr.bf16.mxu0 0
        %424 = vmatmul.mubr.bf16.gmra.mrb[0].mxu0 %v306
        %v425 = vpop.f32.mrb[0].mxu0
        %v426 = vadd.f32 %v269, %v425
        %v427 = vpop.f32.mrb[0].mxu0
        %v428 = vpop.f32.mrb[0].mxu0
        %v429 = vadd.f32 %v269, %v428
        %v430 = vpop.f32.mrb[0].mxu0
        %431 = vmatprep.mubr.bf16.mxu0 0
        %432 = vmatmul.mubr.bf16.gmra.mrb[0].mxu0 %v307
        %v433 = vpop.f32.mrb[0].mxu0
        %v434 = vadd.f32 %v269, %v433
        %v435 = vpop.f32.mrb[0].mxu0
        %v436 = vpop.f32.mrb[0].mxu0
        %v437 = vadd.f32 %v269, %v436
        %v438 = vpop.f32.mrb[0].mxu0
        %439 = vmatprep.mubr.bf16.mxu0 0
        %440 = vmatmul.mubr.bf16.gmra.mrb[0].mxu0 %v308
        %v441 = vpop.f32.mrb[0].mxu0
        %v442 = vadd.f32 %v269, %v441
        %v443 = vpop.f32.mrb[0].mxu0
        %v444 = vpop.f32.mrb[0].mxu0
        %v445 = vadd.f32 %v269, %v444
        %v446 = vpop.f32.mrb[0].mxu0
        %447 = vmatprep.mubr.bf16.mxu0 0
        %448 = vmatmul.mubr.bf16.gmra.mrb[0].mxu0 %v309
        %v449 = vpop.f32.mrb[0].mxu0
        %v450 = vadd.f32 %v269, %v449
        %v451 = vpop.f32.mrb[0].mxu0
        %v452 = vpop.f32.mrb[0].mxu0
        %v453 = vadd.f32 %v269, %v452
        %v454 = vpop.f32.mrb[0].mxu0
        %455 = vmatprep.mubr.bf16.mxu0 0
        %456 = vmatmul.mubr.bf16.gmra.mrb[0].mxu0 %v310
        %v457 = vpop.f32.mrb[0].mxu0
        %v458 = vadd.f32 %v269, %v457
        %v459 = vpop.f32.mrb[0].mxu0
        %v460 = vpop.f32.mrb[0].mxu0
        %v461 = vadd.f32 %v269, %v460
        %v462 = vpop.f32.mrb[0].mxu0
        %463 = vdwg.mxu0
        %v464 = vmax.f32 %v402, 0.0
        %v465 = vmax.f32 %v405, 0.0
        %v466 = vmax.f32 %v410, 0.0
        %v467 = vmax.f32 %v413, 0.0
        %v468 = vmax.f32 %v418, 0.0
        %v469 = vmax.f32 %v421, 0.0
        %v470 = vmax.f32 %v426, 0.0
        %v471 = vmax.f32 %v429, 0.0
        %v472 = vmax.f32 %v434, 0.0
        %v473 = vmax.f32 %v437, 0.0
        %v474 = vmax.f32 %v442, 0.0
        %v475 = vmax.f32 %v445, 0.0
        %v476 = vmax.f32 %v450, 0.0
        %v477 = vmax.f32 %v453, 0.0
        %v478 = vmax.f32 %v458, 0.0
        %v479 = vmax.f32 %v461, 0.0
        %v480 = vpack.c.bf16 %v465, %v464
        %v481 = vpack.c.bf16 %v467, %v466
        %v482 = vpack.c.bf16 %v469, %v468
        %v483 = vpack.c.bf16 %v471, %v470
        %v484 = vpack.c.bf16 %v473, %v472
        %v485 = vpack.c.bf16 %v475, %v474
        %v486 = vpack.c.bf16 %v477, %v476
        %v487 = vpack.c.bf16 %v479, %v478
        %v488 = vld [vmem:[#allocation5 + $0x4] sm:$0xf]
        %v489 = vld [vmem:[#allocation5 + $0x10] sm:$0xf]
        %v490 = vld [vmem:[#allocation5 + $0x1c] sm:$0xf]
        %v491 = vld [vmem:[#allocation5 + $0x28] sm:$0xf]
        %v492 = vld [vmem:[#allocation5 + $0x34] sm:$0xf]
        %v493 = vld [vmem:[#allocation5 + $0x40] sm:$0xf]
        %v494 = vld [vmem:[#allocation5 + $0x4c] sm:$0xf]
        %v495 = vld [vmem:[#allocation5 + $0x58] sm:$0xf]
        %v496 = vld [vmem:[#allocation5 + $0x64] sm:$0xf]
        %v497 = vld [vmem:[#allocation5 + $0x70] sm:$0xf]
        %v498 = vld [vmem:[#allocation5 + $0x7c] sm:$0xf]
        %v499 = vld [vmem:[#allocation5 + $0x88] sm:$0xf]
        %v500 = vld [vmem:[#allocation5 + $0x94] sm:$0xf]
        %v501 = vld [vmem:[#allocation5 + $0xa0] sm:$0xf]
        %v502 = vld [vmem:[#allocation5 + $0xac] sm:$0xf]
        %v503 = vld [vmem:[#allocation5 + $0xb8] sm:$0xf]
        %v504 = vld [vmem:[%s2 + $0x1] sm:$0x1]
        %v506 = vlaneseq
        %v507 = vshrl.u32 %v506, 7
        %v508 = vsub.s32 0, %v507
        %v509 = vrot.slane %v504, %v508
        %v527 = vunpack.c.l.b16 %v488
        %v528 = vunpack.c.l.b16 %v489
        %v529 = vunpack.c.l.b16 %v490
        %v530 = vunpack.c.l.b16 %v491
        %v531 = vunpack.c.l.b16 %v492
        %v532 = vunpack.c.l.b16 %v493
        %v533 = vunpack.c.l.b16 %v494
        %v534 = vunpack.c.l.b16 %v495
        %v535 = vunpack.c.l.b16 %v496
        %v536 = vunpack.c.l.b16 %v497
        %v537 = vunpack.c.l.b16 %v498
        %v538 = vunpack.c.l.b16 %v499
        %v539 = vunpack.c.l.b16 %v500
        %v540 = vunpack.c.l.b16 %v501
        %v541 = vunpack.c.l.b16 %v502
        %v542 = vunpack.c.l.b16 %v503
        %v543 = vpack.c.b16 %v528, %v527
        %v544 = vpack.c.b16 %v530, %v529
        %v545 = vpack.c.b16 %v532, %v531
        %v546 = vpack.c.b16 %v534, %v533
        %v547 = vpack.c.b16 %v536, %v535
        %v548 = vpack.c.b16 %v538, %v537
        %v549 = vpack.c.b16 %v540, %v539
        %v550 = vpack.c.b16 %v542, %v541
        %559 = vmatprep.subr.bf16.mxu0 0
        %560 = vmatpush1.bf16.msra.mxu0 %v543
        %561 = vmatprep.subr.bf16.mxu0 0
        %562 = vmatpush1.bf16.msra.mxu0 %v544
        %563 = vmatprep.subr.bf16.mxu0 0
        %564 = vmatpush1.bf16.msra.mxu0 %v545
        %565 = vmatprep.subr.bf16.mxu0 0
        %566 = vmatpush1.bf16.msra.mxu0 %v546
        %567 = vmatprep.subr.bf16.mxu0 0
        %568 = vmatpush1.bf16.msra.mxu0 %v547
        %569 = vmatprep.subr.bf16.mxu0 0
        %570 = vmatpush1.bf16.msra.mxu0 %v548
        %571 = vmatprep.subr.bf16.mxu0 0
        %572 = vmatpush1.bf16.msra.mxu0 %v549
        %573 = vmatprep.subr.bf16.mxu0 0
        %574 = vmatpush1.bf16.msra.mxu0 %v550
        %575 = vmatprep.subr.bf16.mxu0 0
        %576 = vmatpush1.bf16.msra.mxu0 0
        %577 = vmatprep.subr.bf16.mxu0 0
        %578 = vmatpush1.bf16.msra.mxu0 0
        %579 = vmatprep.subr.bf16.mxu0 0
        %580 = vmatpush1.bf16.msra.mxu0 0
        %581 = vmatprep.subr.bf16.mxu0 0
        %582 = vmatpush1.bf16.msra.mxu0 0
        %583 = vmatprep.subr.bf16.mxu0 0
        %584 = vmatpush1.bf16.msra.mxu0 0
        %585 = vmatprep.subr.bf16.mxu0 0
        %586 = vmatpush1.bf16.msra.mxu0 0
        %587 = vmatprep.subr.bf16.mxu0 0
        %588 = vmatpush1.bf16.msra.mxu0 0
        %589 = vmatprep.subr.bf16.mxu0 0
        %590 = vmatpush1.bf16.msra.mxu0 0
        %591 = vmatprep.mubr.bf16.mxu0 0
        %592 = vmatmul.mubr.bf16.gmra.mrb[0].mxu0 %v480
        %v593 = vpop.f32.mrb[0].mxu0
        %v594 = vadd.f32 %v509, %v593
        %v595 = vpop.f32.mrb[0].mxu0
        %v596 = vpop.f32.mrb[0].mxu0
        %v597 = vadd.f32 %v509, %v596
        %v598 = vpop.f32.mrb[0].mxu0
        %599 = vmatprep.mubr.bf16.mxu0 0
        %600 = vmatmul.mubr.bf16.gmra.mrb[0].mxu0 %v481
        %v601 = vpop.f32.mrb[0].mxu0
        %v602 = vadd.f32 %v509, %v601
        %v603 = vpop.f32.mrb[0].mxu0
        %v604 = vpop.f32.mrb[0].mxu0
        %v605 = vadd.f32 %v509, %v604
        %v606 = vpop.f32.mrb[0].mxu0
        %607 = vmatprep.mubr.bf16.mxu0 0
        %608 = vmatmul.mubr.bf16.gmra.mrb[0].mxu0 %v482
        %v609 = vpop.f32.mrb[0].mxu0
        %v610 = vadd.f32 %v509, %v609
        %v611 = vpop.f32.mrb[0].mxu0
        %v612 = vpop.f32.mrb[0].mxu0
        %v613 = vadd.f32 %v509, %v612
        %v614 = vpop.f32.mrb[0].mxu0
        %615 = vmatprep.mubr.bf16.mxu0 0
        %616 = vmatmul.mubr.bf16.gmra.mrb[0].mxu0 %v483
        %v617 = vpop.f32.mrb[0].mxu0
        %v618 = vadd.f32 %v509, %v617
        %v619 = vpop.f32.mrb[0].mxu0
        %v620 = vpop.f32.mrb[0].mxu0
        %v621 = vadd.f32 %v509, %v620
        %v622 = vpop.f32.mrb[0].mxu0
        %623 = vmatprep.mubr.bf16.mxu0 0
        %624 = vmatmul.mubr.bf16.gmra.mrb[0].mxu0 %v484
        %v625 = vpop.f32.mrb[0].mxu0
        %v626 = vadd.f32 %v509, %v625
        %v627 = vpop.f32.mrb[0].mxu0
        %v628 = vpop.f32.mrb[0].mxu0
        %v629 = vadd.f32 %v509, %v628
        %v630 = vpop.f32.mrb[0].mxu0
        %631 = vmatprep.mubr.bf16.mxu0 0
        %632 = vmatmul.mubr.bf16.gmra.mrb[0].mxu0 %v485
        %v633 = vpop.f32.mrb[0].mxu0
        %v634 = vadd.f32 %v509, %v633
        %v635 = vpop.f32.mrb[0].mxu0
        %v636 = vpop.f32.mrb[0].mxu0
        %v637 = vadd.f32 %v509, %v636
        %v638 = vpop.f32.mrb[0].mxu0
        %639 = vmatprep.mubr.bf16.mxu0 0
        %640 = vmatmul.mubr.bf16.gmra.mrb[0].mxu0 %v486
        %v641 = vpop.f32.mrb[0].mxu0
        %v642 = vadd.f32 %v509, %v641
        %v643 = vpop.f32.mrb[0].mxu0
        %v644 = vpop.f32.mrb[0].mxu0
        %v645 = vadd.f32 %v509, %v644
        %v646 = vpop.f32.mrb[0].mxu0
        %647 = vmatprep.mubr.bf16.mxu0 0
        %648 = vmatmul.mubr.bf16.gmra.mrb[0].mxu0 %v487
        %v649 = vpop.f32.mrb[0].mxu0
        %v650 = vadd.f32 %v509, %v649
        %v651 = vpop.f32.mrb[0].mxu0
        %v652 = vpop.f32.mrb[0].mxu0
        %v653 = vadd.f32 %v509, %v652
        %v654 = vpop.f32.mrb[0].mxu0
        %655 = vdwg.mxu0
        %v656 = vmax.f32 %v594, 0.0
        %v657 = vmax.f32 %v597, 0.0
        %v658 = vmax.f32 %v602, 0.0
        %v659 = vmax.f32 %v605, 0.0
        %v660 = vmax.f32 %v610, 0.0
        %v661 = vmax.f32 %v613, 0.0
        %v662 = vmax.f32 %v618, 0.0
        %v663 = vmax.f32 %v621, 0.0
        %v664 = vmax.f32 %v626, 0.0
        %v665 = vmax.f32 %v629, 0.0
        %v666 = vmax.f32 %v634, 0.0
        %v667 = vmax.f32 %v637, 0.0
        %v668 = vmax.f32 %v642, 0.0
        %v669 = vmax.f32 %v645, 0.0
        %v670 = vmax.f32 %v650, 0.0
        %v671 = vmax.f32 %v653, 0.0
        %v672 = vpack.c.bf16 %v657, %v656
        %v673 = vpack.c.bf16 %v659, %v658
        %v674 = vpack.c.bf16 %v661, %v660
        %v675 = vpack.c.bf16 %v663, %v662
        %v676 = vpack.c.bf16 %v665, %v664
        %v677 = vpack.c.bf16 %v667, %v666
        %v678 = vpack.c.bf16 %v669, %v668
        %v679 = vpack.c.bf16 %v671, %v670
        %v680 = vld [vmem:[#allocation5 + $0x8] sm:$0xf]
        %v681 = vld [vmem:[#allocation5 + $0x14] sm:$0xf]
        %v682 = vld [vmem:[#allocation5 + $0x20] sm:$0xf]
        %v683 = vld [vmem:[#allocation5 + $0x2c] sm:$0xf]
        %v684 = vld [vmem:[#allocation5 + $0x38] sm:$0xf]
        %v685 = vld [vmem:[#allocation5 + $0x44] sm:$0xf]
        %v686 = vld [vmem:[#allocation5 + $0x50] sm:$0xf]
        %v687 = vld [vmem:[#allocation5 + $0x5c] sm:$0xf]
        %v688 = vld [vmem:[#allocation5 + $0x68] sm:$0xf]
        %v689 = vld [vmem:[#allocation5 + $0x74] sm:$0xf]
        %v690 = vld [vmem:[#allocation5 + $0x80] sm:$0xf]
        %v691 = vld [vmem:[#allocation5 + $0x8c] sm:$0xf]
        %v692 = vld [vmem:[#allocation5 + $0x98] sm:$0xf]
        %v693 = vld [vmem:[#allocation5 + $0xa4] sm:$0xf]
        %v694 = vld [vmem:[#allocation5 + $0xb0] sm:$0xf]
        %v695 = vld [vmem:[#allocation5 + $0xbc] sm:$0xf]
        %v696 = vld [vmem:[%s2 + $0x2] sm:$0x1]
        %v698 = vlaneseq
        %v699 = vshrl.u32 %v698, 7
        %v700 = vsub.s32 0, %v699
        %v701 = vrot.slane %v696, %v700
        %v719 = vunpack.c.l.b16 %v680
        %v720 = vunpack.c.l.b16 %v681
        %v721 = vunpack.c.l.b16 %v682
        %v722 = vunpack.c.l.b16 %v683
        %v723 = vunpack.c.l.b16 %v684
        %v724 = vunpack.c.l.b16 %v685
        %v725 = vunpack.c.l.b16 %v686
        %v726 = vunpack.c.l.b16 %v687
        %v727 = vunpack.c.l.b16 %v688
        %v728 = vunpack.c.l.b16 %v689
        %v729 = vunpack.c.l.b16 %v690
        %v730 = vunpack.c.l.b16 %v691
        %v731 = vunpack.c.l.b16 %v692
        %v732 = vunpack.c.l.b16 %v693
        %v733 = vunpack.c.l.b16 %v694
        %v734 = vunpack.c.l.b16 %v695
        %v735 = vpack.c.b16 %v720, %v719
        %v736 = vpack.c.b16 %v722, %v721
        %v737 = vpack.c.b16 %v724, %v723
        %v738 = vpack.c.b16 %v726, %v725
        %v739 = vpack.c.b16 %v728, %v727
        %v740 = vpack.c.b16 %v730, %v729
        %v741 = vpack.c.b16 %v732, %v731
        %v742 = vpack.c.b16 %v734, %v733
        %751 = vmatprep.subr.bf16.mxu0 0
        %752 = vmatpush1.bf16.msra.mxu0 %v735
        %753 = vmatprep.subr.bf16.mxu0 0
        %754 = vmatpush1.bf16.msra.mxu0 %v736
        %755 = vmatprep.subr.bf16.mxu0 0
        %756 = vmatpush1.bf16.msra.mxu0 %v737
        %757 = vmatprep.subr.bf16.mxu0 0
        %758 = vmatpush1.bf16.msra.mxu0 %v738
        %759 = vmatprep.subr.bf16.mxu0 0
        %760 = vmatpush1.bf16.msra.mxu0 %v739
        %761 = vmatprep.subr.bf16.mxu0 0
        %762 = vmatpush1.bf16.msra.mxu0 %v740
        %763 = vmatprep.subr.bf16.mxu0 0
        %764 = vmatpush1.bf16.msra.mxu0 %v741
        %765 = vmatprep.subr.bf16.mxu0 0
        %766 = vmatpush1.bf16.msra.mxu0 %v742
        %767 = vmatprep.subr.bf16.mxu0 0
        %768 = vmatpush1.bf16.msra.mxu0 0
        %769 = vmatprep.subr.bf16.mxu0 0
        %770 = vmatpush1.bf16.msra.mxu0 0
        %771 = vmatprep.subr.bf16.mxu0 0
        %772 = vmatpush1.bf16.msra.mxu0 0
        %773 = vmatprep.subr.bf16.mxu0 0
        %774 = vmatpush1.bf16.msra.mxu0 0
        %775 = vmatprep.subr.bf16.mxu0 0
        %776 = vmatpush1.bf16.msra.mxu0 0
        %777 = vmatprep.subr.bf16.mxu0 0
        %778 = vmatpush1.bf16.msra.mxu0 0
        %779 = vmatprep.subr.bf16.mxu0 0
        %780 = vmatpush1.bf16.msra.mxu0 0
        %781 = vmatprep.subr.bf16.mxu0 0
        %782 = vmatpush1.bf16.msra.mxu0 0
        %783 = vmatprep.mubr.bf16.mxu0 0
        %784 = vmatmul.mubr.bf16.gmra.mrb[0].mxu0 %v672
        %v785 = vpop.f32.mrb[0].mxu0
        %v786 = vadd.f32 %v701, %v785
        %v787 = vpop.f32.mrb[0].mxu0
        %v788 = vpop.f32.mrb[0].mxu0
        %v789 = vadd.f32 %v701, %v788
        %v790 = vpop.f32.mrb[0].mxu0
        %791 = vmatprep.mubr.bf16.mxu0 0
        %792 = vmatmul.mubr.bf16.gmra.mrb[0].mxu0 %v673
        %v793 = vpop.f32.mrb[0].mxu0
        %v794 = vadd.f32 %v701, %v793
        %v795 = vpop.f32.mrb[0].mxu0
        %v796 = vpop.f32.mrb[0].mxu0
        %v797 = vadd.f32 %v701, %v796
        %v798 = vpop.f32.mrb[0].mxu0
        %799 = vmatprep.mubr.bf16.mxu0 0
        %800 = vmatmul.mubr.bf16.gmra.mrb[0].mxu0 %v674
        %v801 = vpop.f32.mrb[0].mxu0
        %v802 = vadd.f32 %v701, %v801
        %v803 = vpop.f32.mrb[0].mxu0
        %v804 = vpop.f32.mrb[0].mxu0
        %v805 = vadd.f32 %v701, %v804
        %v806 = vpop.f32.mrb[0].mxu0
        %807 = vmatprep.mubr.bf16.mxu0 0
        %808 = vmatmul.mubr.bf16.gmra.mrb[0].mxu0 %v675
        %v809 = vpop.f32.mrb[0].mxu0
        %v810 = vadd.f32 %v701, %v809
        %v811 = vpop.f32.mrb[0].mxu0
        %v812 = vpop.f32.mrb[0].mxu0
        %v813 = vadd.f32 %v701, %v812
        %v814 = vpop.f32.mrb[0].mxu0
        %815 = vmatprep.mubr.bf16.mxu0 0
        %816 = vmatmul.mubr.bf16.gmra.mrb[0].mxu0 %v676
        %v817 = vpop.f32.mrb[0].mxu0
        %v818 = vadd.f32 %v701, %v817
        %v819 = vpop.f32.mrb[0].mxu0
        %v820 = vpop.f32.mrb[0].mxu0
        %v821 = vadd.f32 %v701, %v820
        %v822 = vpop.f32.mrb[0].mxu0
        %823 = vmatprep.mubr.bf16.mxu0 0
        %824 = vmatmul.mubr.bf16.gmra.mrb[0].mxu0 %v677
        %v825 = vpop.f32.mrb[0].mxu0
        %v826 = vadd.f32 %v701, %v825
        %v827 = vpop.f32.mrb[0].mxu0
        %v828 = vpop.f32.mrb[0].mxu0
        %v829 = vadd.f32 %v701, %v828
        %v830 = vpop.f32.mrb[0].mxu0
        %831 = vmatprep.mubr.bf16.mxu0 0
        %832 = vmatmul.mubr.bf16.gmra.mrb[0].mxu0 %v678
        %v833 = vpop.f32.mrb[0].mxu0
        %v834 = vadd.f32 %v701, %v833
        %v835 = vpop.f32.mrb[0].mxu0
        %v836 = vpop.f32.mrb[0].mxu0
        %v837 = vadd.f32 %v701, %v836
        %v838 = vpop.f32.mrb[0].mxu0
        %839 = vmatprep.mubr.bf16.mxu0 0
        %840 = vmatmul.mubr.bf16.gmra.mrb[0].mxu0 %v679
        %v841 = vpop.f32.mrb[0].mxu0
        %v842 = vadd.f32 %v701, %v841
        %v843 = vpop.f32.mrb[0].mxu0
        %v844 = vpop.f32.mrb[0].mxu0
        %v845 = vadd.f32 %v701, %v844
        %v846 = vpop.f32.mrb[0].mxu0
        %847 = vdwg.mxu0
        %v848 = vmax.f32 %v786, 0.0
        %v849 = vmax.f32 %v789, 0.0
        %v850 = vmax.f32 %v794, 0.0
        %v851 = vmax.f32 %v797, 0.0
        %v852 = vmax.f32 %v802, 0.0
        %v853 = vmax.f32 %v805, 0.0
        %v854 = vmax.f32 %v810, 0.0
        %v855 = vmax.f32 %v813, 0.0
        %v856 = vmax.f32 %v818, 0.0
        %v857 = vmax.f32 %v821, 0.0
        %v858 = vmax.f32 %v826, 0.0
        %v859 = vmax.f32 %v829, 0.0
        %v860 = vmax.f32 %v834, 0.0
        %v861 = vmax.f32 %v837, 0.0
        %v862 = vmax.f32 %v842, 0.0
        %v863 = vmax.f32 %v845, 0.0
        %v864 = vld [vmem:[%s3] sm:$0x1]
        %v866 = vlaneseq
        %v867 = vshrl.u32 %v866, 7
        %v868 = vsub.s32 0, %v867
        %v869 = vrot.slane %v864, %v868
        %v871 = vmul.f32 %v848, %v869
        %v872 = vmul.f32 %v849, %v869
        %v873 = vmul.f32 %v850, %v869
        %v874 = vmul.f32 %v851, %v869
        %v875 = vmul.f32 %v852, %v869
        %v876 = vmul.f32 %v853, %v869
        %v877 = vmul.f32 %v854, %v869
        %v878 = vmul.f32 %v855, %v869
        %v879 = vmul.f32 %v856, %v869
        %v880 = vmul.f32 %v857, %v869
        %v881 = vmul.f32 %v858, %v869
        %v882 = vmul.f32 %v859, %v869
        %v883 = vmul.f32 %v860, %v869
        %v884 = vmul.f32 %v861, %v869
        %v885 = vmul.f32 %v862, %v869
        %v886 = vmul.f32 %v863, %v869
        %887 = vadd.xlane.f32.xlu0 %v871
        %v888 = vpop.xlane.xlu0 %887
        %889 = vadd.xlane.f32.xlu0 %v872
        %v890 = vpop.xlane.xlu0 %889
        %891 = vadd.xlane.f32.xlu0 %v873
        %v892 = vpop.xlane.xlu0 %891
        %893 = vadd.xlane.f32.xlu0 %v874
        %v894 = vpop.xlane.xlu0 %893
        %895 = vadd.xlane.f32.xlu0 %v875
        %v896 = vpop.xlane.xlu0 %895
        %897 = vadd.xlane.f32.xlu0 %v876
        %v898 = vpop.xlane.xlu0 %897
        %899 = vadd.xlane.f32.xlu0 %v877
        %v900 = vpop.xlane.xlu0 %899
        %901 = vadd.xlane.f32.xlu0 %v878
        %v902 = vpop.xlane.xlu0 %901
        %903 = vadd.xlane.f32.xlu0 %v879
        %v904 = vpop.xlane.xlu0 %903
        %905 = vadd.xlane.f32.xlu0 %v880
        %v906 = vpop.xlane.xlu0 %905
        %907 = vadd.xlane.f32.xlu0 %v881
        %v908 = vpop.xlane.xlu0 %907
        %909 = vadd.xlane.f32.xlu0 %v882
        %v910 = vpop.xlane.xlu0 %909
        %911 = vadd.xlane.f32.xlu0 %v883
        %v912 = vpop.xlane.xlu0 %911
        %913 = vadd.xlane.f32.xlu0 %v884
        %v914 = vpop.xlane.xlu0 %913
        %915 = vadd.xlane.f32.xlu0 %v885
        %v916 = vpop.xlane.xlu0 %915
        %917 = vadd.xlane.f32.xlu0 %v886
        %v918 = vpop.xlane.xlu0 %917
        %v919 = vxor.u32 %v888, 2147483648
        %v920 = vxor.u32 %v890, 2147483648
        %v921 = vxor.u32 %v892, 2147483648
        %v922 = vxor.u32 %v894, 2147483648
        %v923 = vxor.u32 %v896, 2147483648
        %v924 = vxor.u32 %v898, 2147483648
        %v925 = vxor.u32 %v900, 2147483648
        %v926 = vxor.u32 %v902, 2147483648
        %v927 = vxor.u32 %v904, 2147483648
        %v928 = vxor.u32 %v906, 2147483648
        %v929 = vxor.u32 %v908, 2147483648
        %v930 = vxor.u32 %v910, 2147483648
        %v931 = vxor.u32 %v912, 2147483648
        %v932 = vxor.u32 %v914, 2147483648
        %v933 = vxor.u32 %v916, 2147483648
        %v934 = vxor.u32 %v918, 2147483648
        %v935 = vmul.f32 %v919, 1.442695
        %v936 = vpow.pop %v935
        %v937 = vmul.f32 %v920, 1.442695
        %v938 = vpow.pop %v937
        %v939 = vmul.f32 %v921, 1.442695
        %v940 = vpow.pop %v939
        %v941 = vmul.f32 %v922, 1.442695
        %v942 = vpow.pop %v941
        %v943 = vmul.f32 %v923, 1.442695
        %v944 = vpow.pop %v943
        %v945 = vmul.f32 %v924, 1.442695
        %v946 = vpow.pop %v945
        %v947 = vmul.f32 %v925, 1.442695
        %v948 = vpow.pop %v947
        %v949 = vmul.f32 %v926, 1.442695
        %v950 = vpow.pop %v949
        %v951 = vmul.f32 %v927, 1.442695
        %v952 = vpow.pop %v951
        %v953 = vmul.f32 %v928, 1.442695
        %v954 = vpow.pop %v953
        %v955 = vmul.f32 %v929, 1.442695
        %v956 = vpow.pop %v955
        %v957 = vmul.f32 %v930, 1.442695
        %v958 = vpow.pop %v957
        %v959 = vmul.f32 %v931, 1.442695
        %v960 = vpow.pop %v959
        %v961 = vmul.f32 %v932, 1.442695
        %v962 = vpow.pop %v961
        %v963 = vmul.f32 %v933, 1.442695
        %v964 = vpow.pop %v963
        %v965 = vmul.f32 %v934, 1.442695
        %v966 = vpow.pop %v965
        %v967 = vadd.f32 %v936, 1.0
        %v968 = vadd.f32 %v938, 1.0
        %v969 = vadd.f32 %v940, 1.0
        %v970 = vadd.f32 %v942, 1.0
        %v971 = vadd.f32 %v944, 1.0
        %v972 = vadd.f32 %v946, 1.0
        %v973 = vadd.f32 %v948, 1.0
        %v974 = vadd.f32 %v950, 1.0
        %v975 = vadd.f32 %v952, 1.0
        %v976 = vadd.f32 %v954, 1.0
        %v977 = vadd.f32 %v956, 1.0
        %v978 = vadd.f32 %v958, 1.0
        %v979 = vadd.f32 %v960, 1.0
        %v980 = vadd.f32 %v962, 1.0
        %v981 = vadd.f32 %v964, 1.0
        %v982 = vadd.f32 %v966, 1.0
        %v983 = vrcp.pop %v967
        %v984 = vmul.f32 1.0, %v983
        %v985 = vrcp.pop %v968
        %v986 = vmul.f32 1.0, %v985
        %v987 = vrcp.pop %v969
        %v988 = vmul.f32 1.0, %v987
        %v989 = vrcp.pop %v970
        %v990 = vmul.f32 1.0, %v989
        %v991 = vrcp.pop %v971
        %v992 = vmul.f32 1.0, %v991
        %v993 = vrcp.pop %v972
        %v994 = vmul.f32 1.0, %v993
        %v995 = vrcp.pop %v973
        %v996 = vmul.f32 1.0, %v995
        %v997 = vrcp.pop %v974
        %v998 = vmul.f32 1.0, %v997
        %v999 = vrcp.pop %v975
        %v1000 = vmul.f32 1.0, %v999
        %v1001 = vrcp.pop %v976
        %v1002 = vmul.f32 1.0, %v1001
        %v1003 = vrcp.pop %v977
        %v1004 = vmul.f32 1.0, %v1003
        %v1005 = vrcp.pop %v978
        %v1006 = vmul.f32 1.0, %v1005
        %v1007 = vrcp.pop %v979
        %v1008 = vmul.f32 1.0, %v1007
        %v1009 = vrcp.pop %v980
        %v1010 = vmul.f32 1.0, %v1009
        %v1011 = vrcp.pop %v981
        %v1012 = vmul.f32 1.0, %v1011
        %v1013 = vrcp.pop %v982
        %v1014 = vmul.f32 1.0, %v1013
        %v1031 = vlaneseq
        %v1032 = vand.u32 %v1031, 127
        %v1033 = vlaneseq
        %v1034 = vshrl.u32 %v1033, 7
        %v1035 = vsub.s32 %v1032, %v1034
        %v1036 = vrot.slane %v984, %v1035
        %v1037 = vadd.s32 %v1032, 4294967288
        %v1038 = vlaneseq
        %v1039 = vshrl.u32 %v1038, 7
        %v1040 = vsub.s32 %v1037, %v1039
        %v1041 = vrot.slane %v986, %v1040
        %vm1042 = vcmask 130112
        %v1043 = vsel %vm1042, %v1041, %v1036
        %v1044 = vadd.s32 %v1032, 4294967280
        %v1045 = vlaneseq
        %v1046 = vshrl.u32 %v1045, 7
        %v1047 = vsub.s32 %v1044, %v1046
        %v1048 = vrot.slane %v988, %v1047
        %vm1049 = vcmask 195712
        %v1050 = vsel %vm1049, %v1048, %v1043
        %v1051 = vadd.s32 %v1032, 4294967272
        %v1052 = vlaneseq
        %v1053 = vshrl.u32 %v1052, 7
        %v1054 = vsub.s32 %v1051, %v1053
        %v1055 = vrot.slane %v990, %v1054
        %vm1056 = vcmask 261312
        %v1057 = vsel %vm1056, %v1055, %v1050
        %v1058 = vadd.s32 %v1032, 4294967264
        %v1059 = vlaneseq
        %v1060 = vshrl.u32 %v1059, 7
        %v1061 = vsub.s32 %v1058, %v1060
        %v1062 = vrot.slane %v992, %v1061
        %vm1063 = vcmask 326912
        %v1064 = vsel %vm1063, %v1062, %v1057
        %v1065 = vadd.s32 %v1032, 4294967256
        %v1066 = vlaneseq
        %v1067 = vshrl.u32 %v1066, 7
        %v1068 = vsub.s32 %v1065, %v1067
        %v1069 = vrot.slane %v994, %v1068
        %vm1070 = vcmask 392512
        %v1071 = vsel %vm1070, %v1069, %v1064
        %v1072 = vadd.s32 %v1032, 4294967248
        %v1073 = vlaneseq
        %v1074 = vshrl.u32 %v1073, 7
        %v1075 = vsub.s32 %v1072, %v1074
        %v1076 = vrot.slane %v996, %v1075
        %vm1077 = vcmask 458112
        %v1078 = vsel %vm1077, %v1076, %v1071
        %v1079 = vadd.s32 %v1032, 4294967240
        %v1080 = vlaneseq
        %v1081 = vshrl.u32 %v1080, 7
        %v1082 = vsub.s32 %v1079, %v1081
        %v1083 = vrot.slane %v998, %v1082
        %vm1084 = vcmask 523712
        %v1085 = vsel %vm1084, %v1083, %v1078
        %v1086 = vadd.s32 %v1032, 4294967232
        %v1087 = vlaneseq
        %v1088 = vshrl.u32 %v1087, 7
        %v1089 = vsub.s32 %v1086, %v1088
        %v1090 = vrot.slane %v1000, %v1089
        %vm1091 = vcmask 589312
        %v1092 = vsel %vm1091, %v1090, %v1085
        %v1093 = vadd.s32 %v1032, 4294967224
        %v1094 = vlaneseq
        %v1095 = vshrl.u32 %v1094, 7
        %v1096 = vsub.s32 %v1093, %v1095
        %v1097 = vrot.slane %v1002, %v1096
        %vm1098 = vcmask 654912
        %v1099 = vsel %vm1098, %v1097, %v1092
        %v1100 = vadd.s32 %v1032, 4294967216
        %v1101 = vlaneseq
        %v1102 = vshrl.u32 %v1101, 7
        %v1103 = vsub.s32 %v1100, %v1102
        %v1104 = vrot.slane %v1004, %v1103
        %vm1105 = vcmask 720512
        %v1106 = vsel %vm1105, %v1104, %v1099
        %v1107 = vadd.s32 %v1032, 4294967208
        %v1108 = vlaneseq
        %v1109 = vshrl.u32 %v1108, 7
        %v1110 = vsub.s32 %v1107, %v1109
        %v1111 = vrot.slane %v1006, %v1110
        %vm1112 = vcmask 786112
        %v1113 = vsel %vm1112, %v1111, %v1106
        %v1114 = vadd.s32 %v1032, 4294967200
        %v1115 = vlaneseq
        %v1116 = vshrl.u32 %v1115, 7
        %v1117 = vsub.s32 %v1114, %v1116
        %v1118 = vrot.slane %v1008, %v1117
        %vm1119 = vcmask 851712
        %v1120 = vsel %vm1119, %v1118, %v1113
        %v1121 = vadd.s32 %v1032, 4294967192
        %v1122 = vlaneseq
        %v1123 = vshrl.u32 %v1122, 7
        %v1124 = vsub.s32 %v1121, %v1123
        %v1125 = vrot.slane %v1010, %v1124
        %vm1126 = vcmask 917312
        %v1127 = vsel %vm1126, %v1125, %v1120
        %v1128 = vadd.s32 %v1032, 4294967184
        %v1129 = vlaneseq
        %v1130 = vshrl.u32 %v1129, 7
        %v1131 = vsub.s32 %v1128, %v1130
        %v1132 = vrot.slane %v1012, %v1131
        %vm1133 = vcmask 982912
        %v1134 = vsel %vm1133, %v1132, %v1127
        %v1135 = vadd.s32 %v1032, 4294967176
        %v1136 = vlaneseq
        %v1137 = vshrl.u32 %v1136, 7
        %v1138 = vsub.s32 %v1135, %v1137
        %v1139 = vrot.slane %v1014, %v1138
        %vm1140 = vcmask 1048512
        %v1141 = vsel %vm1140, %v1139, %v1134
        %1143 = vst [vmem:[%s229] sm:$0x1] %v1141
        %s1144 = sand.u32 %s119, 1
        %s1145 = scalar_lea.sflag [#allocation4], %s1144
        %s1146 = sand.u32 %s119, 1
        %s1147 = scalar_lea.vmem [#allocation7], %s1146
        // Predicated region
        $region45: #{tpu_custom_call.1} parent=35 // pred_check
          %p1148 = pneg %p129
        $region46: #{tpu_custom_call.1} parent=35 // pred_check_branch
          %1150 = sbr.rel (%p1148) target = $region48
        $region47: #{tpu_custom_call.1} parent=35 // pred_region
          %s1152 = ssub.s32 16, 16
          %1153 = vsyncadd %s1145, %s1152
          %s1154 = smul.addr %s22, 16
          %s1155 = scalar_lea.hbm %s4, %s1154
          %s1157 = sshll.u32 %s1147, 4
          %s1158 = int_to_ptr.vmem [resolvable:$true] %s1157
          %1160 = dma.vmem_to_hbm [thread:$0]  %s1158, 16, %s1155, %s1145
        $region48: #{tpu_custom_call.1} parent=35 // pred_fallthru
          _
      $region36: #{tpu_custom_call.1} parent=5 // pred_fallthru
        _
      %p1161 = scmp.le.s32.totalorder 2, %s17
      // Predicated region
      $region49: #{tpu_custom_call.1} parent=5 // pred_check
        %p1162 = pneg %p1161
      $region50: #{tpu_custom_call.1} parent=5 // pred_check_branch
        %1164 = sbr.rel (%p1162) target = $region52
      $region51: #{tpu_custom_call.1} parent=5 // pred_region
        %s1165 = ssub.s32 %s17, 2
        // Predicated region
        $region53: #{tpu_custom_call.1} parent=51 // pred_check
          %p1166 = pneg %p135
        $region54: #{tpu_custom_call.1} parent=51 // pred_check_branch
          %1168 = sbr.rel (%p1166) target = $region56
        $region55: #{tpu_custom_call.1} parent=51 // pred_region
          %s1169 = sand.u32 %s120, 1
          %s1170 = scalar_lea.sflag [#allocation4], %s1169
          %s1171 = sand.u32 %s120, 1
          %s1172 = scalar_lea.vmem [#allocation7], %s1171
          %1173 = dma.done %s1170, 16
        $region56: #{tpu_custom_call.1} parent=51 // pred_fallthru
          _
      $region52: #{tpu_custom_call.1} parent=5 // pred_fallthru
        _
    $region6: #{tpu_custom_call.1} parent=1 // loop_footer
      %s21 = sadd.s32 1, %s17
    $region7: #{tpu_custom_call.1} parent=1 // loop_footer_branch
      %16 = sbr.rel target = $region3
    $region8: #{tpu_custom_call.1} parent=1 // loop_exit
      _
    %1174 = vsyncpa [#allocation3], 1
    %s1175 = scalar_lea.sflag [#allocation3], 1
    %1176 = vsyncpa %s1175, 1
    %1177 = vsyncpa [#allocation6], 1
    %1178 = vsyncpa [#allocation4], 1
    %s1179 = scalar_lea.sflag [#allocation4], 1
    %1180 = vsyncpa %s1179, 1

</llo_original>
